<compile_context>
chip_gen: v5e
topology: v5e:2x2
jax: 0.10.0
libtpu: 0.0.40
codegen_flags: <defaults>
</compile_context>

<pallas_src>
import functools

import jax
import jax.numpy as jnp
from jax.experimental import pallas as pl
from jax.experimental.pallas import tpu as pltpu

LANE = 128
SUBLANE = 8


def _round_up(x, m):
    return (x + m - 1) // m * m


# ----------------------------------------------------------------------------
# Pallas kernel: one batch tile of the whole MLP hot path.
# ----------------------------------------------------------------------------
def critic_kernel(x_ref, w1_ref, b1_ref, w2_ref, w3_ref, b3_ref, out_ref):
    x = x_ref[...]                       # (TB, S+A) f32
    k1 = x.shape[1]

    # ---- layer 1 (+ action passthrough + constant-one column) ----------------
    # K = S+A is tiny -> VPU broadcast-FMAs; start from the bias to save a pass.
    h = b1_ref[...] + x[:, 0:1] * w1_ref[0:1, :]
    for k in range(1, k1):               # static trip count -> unrolled
        h = h + x[:, k:k + 1] * w1_ref[k:k + 1, :]
    h = jnp.maximum(h, 0.0)               # (TB, F1E) f32

    # ---- layer 2: one MXU matmul (state branch + action branch + b2 folded) --
    # bf16 operands, f32 accumulation.
    h2 = jnp.dot(h.astype(jnp.bfloat16), w2_ref[...],
                 preferred_element_type=jnp.float32)
    h2 = jnp.maximum(h2, 0.0)              # (TB, F2P) f32

    # ---- layer 3: N = 1 -> VPU multiply + XLU row reduction ------------------
    q = jnp.sum(h2 * w3_ref[...], axis=-1, keepdims=True) + b3_ref[...]
    out_ref[...] = q                        # (TB, 1)


# ----------------------------------------------------------------------------
# One-time parameter layout conversion (hoisted out of the forward hot path).
# ----------------------------------------------------------------------------
def prepare_critic_params(params, state_size, action_size,
                          fcs1_units, fc2_units):
    """Build the folded / transposed weights.

    Layer-1 output is extended with 2*A passthrough columns (relu(+a), relu(-a))
    and one constant-one column, so the action contribution and b2 ride through
    the single layer-2 MXU matmul.  W2e is stored in bf16 (dominant HBM fetch);
    the contraction dim is only rounded up to a sublane multiple, not 128.
    """
    w1, b1, w2, b2, w3, b3 = params       # PyTorch layout: W is (out, in)
    S, A = state_size, action_size
    F1, F2 = fcs1_units, fc2_units
    f1e = _round_up(F1 + 2 * A + 1, SUBLANE)   # 403 -> 408 (no 128-pad in HBM)
    f2p = _round_up(F2, LANE)                  # 300 -> 384

    eye_a = jnp.eye(A, dtype=jnp.float32)

    w1e = jnp.zeros((S + A, f1e), jnp.float32)
    w1e = w1e.at[:S, :F1].set(w1.T.astype(jnp.float32))
    w1e = w1e.at[S:S + A, F1:F1 + A].set(eye_a)            # -> relu(+action)
    w1e = w1e.at[S:S + A, F1 + A:F1 + 2 * A].set(-eye_a)   # -> relu(-action)

    b1e = jnp.zeros((1, f1e), jnp.float32)
    b1e = b1e.at[0, :F1].set(b1.astype(jnp.float32))
    b1e = b1e.at[0, F1 + 2 * A].set(1.0)                    # constant-one column

    w2s = w2[:, :F1].T.astype(jnp.float32)                  # (F1, F2)
    w2a = w2[:, F1:].T.astype(jnp.float32)                  # (A,  F2)
    w2e = jnp.zeros((f1e, f2p), jnp.float32)
    w2e = w2e.at[:F1, :F2].set(w2s)
    w2e = w2e.at[F1:F1 + A, :F2].set(w2a)                   # x relu(+a)
    w2e = w2e.at[F1 + A:F1 + 2 * A, :F2].set(-w2a)          # x relu(-a)
    w2e = w2e.at[F1 + 2 * A, :F2].set(b2.astype(jnp.float32))  # bias row (x 1)
    w2e = w2e.astype(jnp.bfloat16)          # halves the dominant weight DMA

    w3_row = jnp.zeros((1, f2p), jnp.float32).at[:, :F2].set(
        w3.reshape(1, -1).astype(jnp.float32))
    b3_p = b3.reshape(1, 1).astype(jnp.float32)
    return (w1e, b1e, w2e, w3_row, b3_p)


# ----------------------------------------------------------------------------
# Forward wrapper: batch-tiled grid, jitted.
# ----------------------------------------------------------------------------
@functools.partial(jax.jit, static_argnames=("batch_tile",))
def critic_forward(state, action, prepped, batch_tile=256):
    w1e, b1e, w2e, w3_row, b3_p = prepped

    # Single combined input array -> one narrow input DMA per tile.
    x = jnp.concatenate([state.astype(jnp.float32),
                         action.astype(jnp.float32)], axis=1)   # (B, S+A)
    B, k1 = x.shape
    f1e = w1e.shape[1]
    f2p = w2e.shape[1]

    tb = min(batch_tile, _round_up(B, SUBLANE))
    bp = _round_up(B, tb)
    if bp != B:
        x = jnp.pad(x, ((0, bp - B), (0, 0)))
    num_tiles = bp // tb

    # Weight-DMA-bound at small batch: don't shard a 1-2 tile grid across the
    # two v7x TensorCores and fetch the weights twice.
    semantics = ("parallel",) if num_tiles >= 4 else ("arbitrary",)

    flops = 2 * bp * (k1 * f1e + f1e * f2p + f2p)
    bytes_accessed = (4 * x.size + 4 * w1e.size + 4 * b1e.size + 2 * w2e.size
                      + 4 * w3_row.size + 4 * b3_p.size + 4 * bp)

    out = pl.pallas_call(
        critic_kernel,
        out_shape=jax.ShapeDtypeStruct((bp, 1), jnp.float32),
        grid=(num_tiles,),
        in_specs=[
            pl.BlockSpec((tb, k1), lambda i: (i, 0)),       # [state|action] tile
            pl.BlockSpec((k1, f1e), lambda i: (0, 0)),      # W1e (extended)
            pl.BlockSpec((1, f1e), lambda i: (0, 0)),       # b1e
            pl.BlockSpec((f1e, f2p), lambda i: (0, 0)),     # W2e (bf16, folded)
            pl.BlockSpec((1, f2p), lambda i: (0, 0)),       # w3 as row vector
            pl.BlockSpec((1, 1), lambda i: (0, 0)),         # b3 scalar
        ],
        out_specs=pl.BlockSpec((tb, 1), lambda i: (i, 0)),
        compiler_params=pltpu.CompilerParams(dimension_semantics=semantics),
        cost_estimate=pl.CostEstimate(flops=flops, transcendentals=0,
                                      bytes_accessed=bytes_accessed),
    )(x, w1e, b1e, w2e, w3_row, b3_p)

    return out[:B]


# ----------------------------------------------------------------------------
# Deterministic parameter init (mimics nn.Linear default U(-1/sqrt(fan_in), ..))
# ----------------------------------------------------------------------------
def init_linear(key, out_features, in_features):
    kw, kb = jax.random.split(key)
    bound = 1.0 / jnp.sqrt(jnp.float32(in_features))
    w = jax.random.uniform(kw, (out_features, in_features), jnp.float32,
                           -bound, bound)
    b = jax.random.uniform(kb, (out_features,), jnp.float32, -bound, bound)
    return w, b


def reference_forward(state, action, params):
    """Plain-JAX f32 reference matching the PyTorch forward exactly."""
    w1, b1, w2, b2, w3, b3 = params
    xs = jax.nn.relu(state @ w1.T + b1)
    x = jnp.concatenate([xs, action], axis=1)
    x = jax.nn.relu(x @ w2.T + b2)
    return x @ w3.T + b3


if __name__ == "__main__":
    # Pendulum-like sizes: state_size=3, action_size=1, hidden 400/300.
    state_size, action_size = 3, 1
    fcs1_units, fc2_units = 400, 300
    batch = 8

    key = jax.random.PRNGKey(0)
    k1, k2, k3, ks, ka = jax.random.split(key, 5)

    w1, b1 = init_linear(k1, fcs1_units, state_size)
    w2, b2 = init_linear(k2, fc2_units, fcs1_units + action_size)
    w3, b3 = init_linear(k3, 1, fc2_units)
    params = (w1, b1, w2, b2, w3, b3)

    state = jax.random.normal(ks, (batch, state_size), jnp.float32)
    action = jax.random.normal(ka, (batch, action_size), jnp.float32)

    # One-time layout prep (hoisted out of the per-call hot path).
    prepped = jax.block_until_ready(
        prepare_critic_params(params, state_size, action_size,
                              fcs1_units, fc2_units))

    q = jax.block_until_ready(critic_forward(state, action, prepped))
    q_ref = reference_forward(state, action, params)

    assert q.shape == (batch, 1)
    # bf16 MXU path -> tolerance deliberately relaxed vs the f32 reference.
    max_err = jnp.max(jnp.abs(q - q_ref))
    assert jnp.allclose(q, q_ref, atol=2e-2, rtol=2e-2), (
        f"mismatch: max abs err {max_err}")

    print("KERNEL_OK")
</pallas_src>

<mosaic_0001>
module attributes {stable_mosaic.version = 11 : i64} {
  func.func @critic_kernel(%arg0: i32, %arg1: memref<8x4xf32, #tpu.memory_space<vmem>>, %arg2: memref<4x408xf32, #tpu.memory_space<vmem>>, %arg3: memref<1x408xf32, #tpu.memory_space<vmem>>, %arg4: memref<408x384xbf16, #tpu.memory_space<vmem>>, %arg5: memref<1x384xf32, #tpu.memory_space<vmem>>, %arg6: memref<1x1xf32, #tpu.memory_space<vmem>>, %arg7: memref<8x1xf32, #tpu.memory_space<vmem>>) attributes {dimension_semantics = [#tpu.dimension_semantics<arbitrary>], iteration_bounds = array<i64: 1>, scalar_prefetch = 0 : i64, scratch_operands = 0 : i64, tpu.core_type = #tpu.core_type<tc>, window_params = [{transform_indices = @transform_0, window_bounds = array<i64: 8, 4>}, {pipeline_mode = #tpu.pipeline_mode<synchronous>, transform_indices = @transform_1, window_bounds = array<i64: 4, 408>}, {pipeline_mode = #tpu.pipeline_mode<synchronous>, transform_indices = @transform_2, window_bounds = array<i64: 1, 408>}, {pipeline_mode = #tpu.pipeline_mode<synchronous>, transform_indices = @transform_3, window_bounds = array<i64: 408, 384>}, {pipeline_mode = #tpu.pipeline_mode<synchronous>, transform_indices = @transform_4, window_bounds = array<i64: 1, 384>}, {pipeline_mode = #tpu.pipeline_mode<synchronous>, transform_indices = @transform_5, window_bounds = array<i64: 1, 1>}, {transform_indices = @transform_6, window_bounds = array<i64: 8, 1>}]} {
    %c0 = arith.constant 0 : index
    %c0_0 = arith.constant 0 : index
    %0 = vector.load %arg1[%c0, %c0_0] : memref<8x4xf32, #tpu.memory_space<vmem>>, vector<8x4xf32>
    %c0_1 = arith.constant 0 : index
    %c0_2 = arith.constant 0 : index
    %1 = vector.load %arg3[%c0_1, %c0_2] : memref<1x408xf32, #tpu.memory_space<vmem>>, vector<1x408xf32>
    %2 = vector.extract_strided_slice %0 {offsets = [0, 0], sizes = [8, 1], strides = [1, 1]} : vector<8x4xf32> to vector<8x1xf32>
    %c0_3 = arith.constant 0 : index
    %c0_4 = arith.constant 0 : index
    %3 = vector.load %arg2[%c0_3, %c0_4] : memref<4x408xf32, #tpu.memory_space<vmem>>, vector<1x408xf32>
    %4 = vector.broadcast %2 : vector<8x1xf32> to vector<8x408xf32>
    %5 = vector.broadcast %3 : vector<1x408xf32> to vector<8x408xf32>
    %6 = arith.mulf %4, %5 : vector<8x408xf32>
    %7 = vector.broadcast %1 : vector<1x408xf32> to vector<8x408xf32>
    %8 = arith.addf %7, %6 : vector<8x408xf32>
    %9 = vector.extract_strided_slice %0 {offsets = [0, 1], sizes = [8, 1], strides = [1, 1]} : vector<8x4xf32> to vector<8x1xf32>
    %c1 = arith.constant 1 : index
    %c0_5 = arith.constant 0 : index
    %10 = vector.load %arg2[%c1, %c0_5] : memref<4x408xf32, #tpu.memory_space<vmem>>, vector<1x408xf32>
    %11 = vector.broadcast %9 : vector<8x1xf32> to vector<8x408xf32>
    %12 = vector.broadcast %10 : vector<1x408xf32> to vector<8x408xf32>
    %13 = arith.mulf %11, %12 : vector<8x408xf32>
    %14 = arith.addf %8, %13 : vector<8x408xf32>
    %15 = vector.extract_strided_slice %0 {offsets = [0, 2], sizes = [8, 1], strides = [1, 1]} : vector<8x4xf32> to vector<8x1xf32>
    %c2 = arith.constant 2 : index
    %c0_6 = arith.constant 0 : index
    %16 = vector.load %arg2[%c2, %c0_6] : memref<4x408xf32, #tpu.memory_space<vmem>>, vector<1x408xf32>
    %17 = vector.broadcast %15 : vector<8x1xf32> to vector<8x408xf32>
    %18 = vector.broadcast %16 : vector<1x408xf32> to vector<8x408xf32>
    %19 = arith.mulf %17, %18 : vector<8x408xf32>
    %20 = arith.addf %14, %19 : vector<8x408xf32>
    %21 = vector.extract_strided_slice %0 {offsets = [0, 3], sizes = [8, 1], strides = [1, 1]} : vector<8x4xf32> to vector<8x1xf32>
    %c3 = arith.constant 3 : index
    %c0_7 = arith.constant 0 : index
    %22 = vector.load %arg2[%c3, %c0_7] : memref<4x408xf32, #tpu.memory_space<vmem>>, vector<1x408xf32>
    %23 = vector.broadcast %21 : vector<8x1xf32> to vector<8x408xf32>
    %24 = vector.broadcast %22 : vector<1x408xf32> to vector<8x408xf32>
    %25 = arith.mulf %23, %24 : vector<8x408xf32>
    %26 = arith.addf %20, %25 : vector<8x408xf32>
    %cst = arith.constant 0.000000e+00 : f32
    %27 = vector.broadcast %cst : f32 to vector<8x408xf32>
    %28 = arith.maximumf %26, %27 : vector<8x408xf32>
    %29 = arith.truncf %28 : vector<8x408xf32> to vector<8x408xbf16>
    %c0_8 = arith.constant 0 : index
    %c0_9 = arith.constant 0 : index
    %30 = vector.load %arg4[%c0_8, %c0_9] : memref<408x384xbf16, #tpu.memory_space<vmem>>, vector<408x384xbf16>
    %cst_10 = arith.constant dense<0.000000e+00> : vector<8x384xf32>
    %31 = tpu.matmul %29, %30, %cst_10 {dimension_numbers = #tpu.dot_dimension_numbers<[1], [0], [0], [1], [0, 0, 1, 1], [], []>} : vector<8x408xbf16>, vector<408x384xbf16>, vector<8x384xf32> -> vector<8x384xf32>
    %cst_11 = arith.constant 0.000000e+00 : f32
    %32 = vector.broadcast %cst_11 : f32 to vector<8x384xf32>
    %33 = arith.maximumf %31, %32 : vector<8x384xf32>
    %c0_12 = arith.constant 0 : index
    %c0_13 = arith.constant 0 : index
    %34 = vector.load %arg5[%c0_12, %c0_13] : memref<1x384xf32, #tpu.memory_space<vmem>>, vector<1x384xf32>
    %35 = vector.broadcast %34 : vector<1x384xf32> to vector<8x384xf32>
    %36 = arith.mulf %33, %35 : vector<8x384xf32>
    %cst_14 = arith.constant dense<0.000000e+00> : vector<8xf32>
    %37 = vector.multi_reduction <add>, %36, %cst_14 [1] : vector<8x384xf32> to vector<8xf32>
    %38 = vector.shape_cast %37 : vector<8xf32> to vector<8x1xf32>
    %c0_15 = arith.constant 0 : index
    %c0_16 = arith.constant 0 : index
    %39 = vector.load %arg6[%c0_15, %c0_16] : memref<1x1xf32, #tpu.memory_space<vmem>>, vector<1x1xf32>
    %40 = vector.broadcast %39 : vector<1x1xf32> to vector<8x1xf32>
    %41 = arith.addf %38, %40 : vector<8x1xf32>
    %c0_17 = arith.constant 0 : index
    %c0_18 = arith.constant 0 : index
    %42 = vector.load %arg7[%c0_17, %c0_18] : memref<8x1xf32, #tpu.memory_space<vmem>>, vector<8x1xf32>
    tpu.vector_store %arg7[%c0_17, %c0_18], %41 {strides = array<i32>} : memref<8x1xf32, #tpu.memory_space<vmem>>, vector<8x1xf32>,
    return
  }
  func.func @transform_0(%arg0: i32) -> (i32, i32) {
    %c0_i32 = arith.constant 0 : i32
    %c0_i32_0 = arith.constant 0 : i32
    return %arg0, %c0_i32 : i32, i32
  }
  func.func @transform_1(%arg0: i32) -> (i32, i32) {
    %c0_i32 = arith.constant 0 : i32
    %c0_i32_0 = arith.constant 0 : i32
    %c0_i32_1 = arith.constant 0 : i32
    return %c0_i32, %c0_i32_0 : i32, i32
  }
  func.func @transform_2(%arg0: i32) -> (i32, i32) {
    %c0_i32 = arith.constant 0 : i32
    %c0_i32_0 = arith.constant 0 : i32
    %c0_i32_1 = arith.constant 0 : i32
    return %c0_i32, %c0_i32_0 : i32, i32
  }
  func.func @transform_3(%arg0: i32) -> (i32, i32) {
    %c0_i32 = arith.constant 0 : i32
    %c0_i32_0 = arith.constant 0 : i32
    %c0_i32_1 = arith.constant 0 : i32
    return %c0_i32, %c0_i32_0 : i32, i32
  }
  func.func @transform_4(%arg0: i32) -> (i32, i32) {
    %c0_i32 = arith.constant 0 : i32
    %c0_i32_0 = arith.constant 0 : i32
    %c0_i32_1 = arith.constant 0 : i32
    return %c0_i32, %c0_i32_0 : i32, i32
  }
  func.func @transform_5(%arg0: i32) -> (i32, i32) {
    %c0_i32 = arith.constant 0 : i32
    %c0_i32_0 = arith.constant 0 : i32
    %c0_i32_1 = arith.constant 0 : i32
    return %c0_i32, %c0_i32_0 : i32, i32
  }
  func.func @transform_6(%arg0: i32) -> (i32, i32) {
    %c0_i32 = arith.constant 0 : i32
    %c0_i32_0 = arith.constant 0 : i32
    return %arg0, %c0_i32 : i32, i32
  }
}

</mosaic_0001>

<llo_original>
// kernel: critic_forward.1
$region0: #{critic_forward.1}
  #allocation0 [shape = 'u32[]', space=smem, size = 0x4, offset = 0x4, fixed_abs, tag = 'smem constant byte address 0x4 - core index']
  #allocation1 [shape = 'u32[72,128]{1,0:T(1,128)}', space=vmem, size = 0x9000, scoped, tag = 'internal scratch']
  #allocation2 [shape = 'f32[1,1]{1,0:T(1,128)S(1)}', space=vmem, size = 0x200, scoped, tag = 'scoped memory for critic_forward.1']
  %s0 = inlined_call_operand.vmem [shape: f32[8,4], index: 0, kind: input, shape index: {}]
  %s1 = inlined_call_operand.vmem [shape: f32[4,408], index: 1, kind: input, shape index: {}]
  %s2 = inlined_call_operand.vmem [shape: f32[1,408], index: 2, kind: input, shape index: {}]
  %s3 = inlined_call_operand.hbm [shape: bf16[408,384], index: 3, kind: input, shape index: {}]
  %s4 = inlined_call_operand.vmem [shape: f32[1,384], index: 4, kind: input, shape index: {}]
  %s5 = inlined_call_operand.<no memory space> [shape: f32[1,1], index: 5, kind: input, shape index: {}]
  %s6 = inlined_call_operand.vmem [shape: f32[8,1], index: 6, kind: output, shape index: {}]
  %s7 = sld [smem:[#allocation0]]
  $region38: #{critic_forward.1} parent=0
    _
  %s9 = ssub.s32 1, %s7
  %s10 = scalar_select 0, %s9, %s7
  %v11 = vstv %s5
  %12 = vst [vmem:[#allocation2] sm:$0x1] %v11
  $region1: #{critic_forward.1} parent=0
    #allocation3 [shape = 'u8[313344]{0}', space=vmem, size = 0x4c800, scoped, tag = 'input window, operand 3, single buffered']
    #allocation4 [shape = 's32[1]{0}', space=sflag, size = 0x4, scoped, tag = 'scoped memory for critic_forward.1']
    %13 = vsyncpa [#allocation4], 0
    // Predicated region
    $region2: #{critic_forward.1} parent=1 // pred_check
      _
    $region3: #{critic_forward.1} parent=1 // pred_check_branch
      %15 = sbr.rel (0) target = $region5
    $region4: #{critic_forward.1} parent=1 // pred_region
      _
    $region5: #{critic_forward.1} parent=1 // pred_fallthru
      _
    // Predicated region
    $region6: #{critic_forward.1} parent=1 // pred_check
      _
    $region7: #{critic_forward.1} parent=1 // pred_check_branch
      %17 = sbr.rel (0) target = $region9
    $region8: #{critic_forward.1} parent=1 // pred_region
      _
    $region9: #{critic_forward.1} parent=1 // pred_fallthru
      _
    // Predicated region
    $region10: #{critic_forward.1} parent=1 // pred_check
      _
    $region11: #{critic_forward.1} parent=1 // pred_check_branch
      %19 = sbr.rel (0) target = $region13
    $region12: #{critic_forward.1} parent=1 // pred_region
      _
    $region13: #{critic_forward.1} parent=1 // pred_fallthru
      _
    // Predicated region
    $region14: #{critic_forward.1} parent=1 // pred_check
      _
    $region15: #{critic_forward.1} parent=1 // pred_check_branch
      %21 = sbr.rel (0) target = $region17
    $region16: #{critic_forward.1} parent=1 // pred_region
      %23 = vsyncadd [#allocation4], 0
      %s24 = sshll.u32 %s3, 4
      %s25 = int_to_ptr.hbm [resolvable:$true] %s24
      %s26 = sshll.u32 [#allocation3], 4
      %s27 = int_to_ptr.vmem [resolvable:$true] %s26
      %32 = dma.hbm_to_vmem [thread:$0]  %s25, 9792, %s27, [#allocation4], 192, 192, 12
    $region17: #{critic_forward.1} parent=1 // pred_fallthru
      _
    // Predicated region
    $region18: #{critic_forward.1} parent=1 // pred_check
      _
    $region19: #{critic_forward.1} parent=1 // pred_check_branch
      %34 = sbr.rel (0) target = $region21
    $region20: #{critic_forward.1} parent=1 // pred_region
      _
    $region21: #{critic_forward.1} parent=1 // pred_fallthru
      _
    // Predicated region
    $region22: #{critic_forward.1} parent=1 // pred_check
      _
    $region23: #{critic_forward.1} parent=1 // pred_check_branch
      %36 = sbr.rel (0) target = $region25
    $region24: #{critic_forward.1} parent=1 // pred_region
      _
    $region25: #{critic_forward.1} parent=1 // pred_fallthru
      _
    // Predicated region
    $region26: #{critic_forward.1} parent=1 // pred_check
      _
    $region27: #{critic_forward.1} parent=1 // pred_check_branch
      %38 = sbr.rel (0) target = $region29
    $region28: #{critic_forward.1} parent=1 // pred_region
      %40 = dma.done [#allocation4], 9792
    $region29: #{critic_forward.1} parent=1 // pred_fallthru
      _
    %v42 = vld [vmem:[%s0] sm:$0xff]
    %v43 = vld [vmem:[%s2] sm:$0xf]
    %v44 = vld [vmem:[%s1] ss:$4 sm:$0xf]
    %46 = vset.pattern.permute.xlu0 0
    %47 = vperm.xlu0 %46, %v42
    %v48 = vpop.permute.xlu0 %47
    %v51 = vperm.slane %v44, 0
    %v52 = vperm.slane %v44, 1
    %v53 = vperm.slane %v44, 2
    %v54 = vperm.slane %v44, 3
    %v59 = vmul.f32 %v48, %v51
    %v60 = vmul.f32 %v48, %v52
    %v61 = vmul.f32 %v48, %v53
    %v62 = vmul.f32 %v48, %v54
    %v64 = vperm.slane %v43, 0
    %v65 = vperm.slane %v43, 1
    %v66 = vperm.slane %v43, 2
    %v67 = vperm.slane %v43, 3
    %v72 = vadd.f32 %v64, %v59
    %v73 = vadd.f32 %v65, %v60
    %v74 = vadd.f32 %v66, %v61
    %v75 = vadd.f32 %v67, %v62
    %s76 = scalar_lea.vmem %s1, 1
    %v77 = vld [vmem:[%s76] ss:$4 sm:$0xf]
    %78 = vset.pattern.permute.xlu0 1
    %79 = vperm.xlu0 %78, %v42
    %v80 = vpop.permute.xlu0 %79
    %v83 = vperm.slane %v77, 0
    %v84 = vperm.slane %v77, 1
    %v85 = vperm.slane %v77, 2
    %v86 = vperm.slane %v77, 3
    %v91 = vmul.f32 %v80, %v83
    %v92 = vmul.f32 %v80, %v84
    %v93 = vmul.f32 %v80, %v85
    %v94 = vmul.f32 %v80, %v86
    %v95 = vadd.f32 %v72, %v91
    %v96 = vadd.f32 %v73, %v92
    %v97 = vadd.f32 %v74, %v93
    %v98 = vadd.f32 %v75, %v94
    %s99 = scalar_lea.vmem %s1, 2
    %v100 = vld [vmem:[%s99] ss:$4 sm:$0xf]
    %101 = vset.pattern.permute.xlu0 2
    %102 = vperm.xlu0 %101, %v42
    %v103 = vpop.permute.xlu0 %102
    %v106 = vperm.slane %v100, 0
    %v107 = vperm.slane %v100, 1
    %v108 = vperm.slane %v100, 2
    %v109 = vperm.slane %v100, 3
    %v114 = vmul.f32 %v103, %v106
    %v115 = vmul.f32 %v103, %v107
    %v116 = vmul.f32 %v103, %v108
    %v117 = vmul.f32 %v103, %v109
    %v118 = vadd.f32 %v95, %v114
    %v119 = vadd.f32 %v96, %v115
    %v120 = vadd.f32 %v97, %v116
    %v121 = vadd.f32 %v98, %v117
    %s122 = scalar_lea.vmem %s1, 3
    %v123 = vld [vmem:[%s122] ss:$4 sm:$0xf]
    %124 = vset.pattern.permute.xlu0 3
    %125 = vperm.xlu0 %124, %v42
    %v126 = vpop.permute.xlu0 %125
    %v129 = vperm.slane %v123, 0
    %v130 = vperm.slane %v123, 1
    %v131 = vperm.slane %v123, 2
    %v132 = vperm.slane %v123, 3
    %v137 = vmul.f32 %v126, %v129
    %v138 = vmul.f32 %v126, %v130
    %v139 = vmul.f32 %v126, %v131
    %v140 = vmul.f32 %v126, %v132
    %v141 = vadd.f32 %v118, %v137
    %v142 = vadd.f32 %v119, %v138
    %v143 = vadd.f32 %v120, %v139
    %v144 = vadd.f32 %v121, %v140
    %v145 = vmax.f32 %v141, 0.0
    %v146 = vmax.f32 %v142, 0.0
    %v147 = vmax.f32 %v143, 0.0
    %v148 = vmax.f32 %v144, 0.0
    %v149 = vpack.c.bf16 %v145, %v145
    %v150 = vpack.c.bf16 %v146, %v146
    %v151 = vpack.c.bf16 %v147, %v147
    %v152 = vpack.c.bf16 %v148, %v148
    %v153 = vld [vmem:[#allocation3] sm:$0xff]
    %v154 = vld [vmem:[#allocation3 + $0x8] sm:$0xf]
    %v155 = vld [vmem:[#allocation3 + $0xc] sm:$0xff]
    %v156 = vld [vmem:[#allocation3 + $0x14] sm:$0xf]
    %v157 = vld [vmem:[#allocation3 + $0x18] sm:$0xff]
    %v158 = vld [vmem:[#allocation3 + $0x20] sm:$0xf]
    %v159 = vld [vmem:[#allocation3 + $0x24] sm:$0xff]
    %v160 = vld [vmem:[#allocation3 + $0x2c] sm:$0xf]
    %v161 = vld [vmem:[#allocation3 + $0x30] sm:$0xff]
    %v162 = vld [vmem:[#allocation3 + $0x38] sm:$0xf]
    %v163 = vld [vmem:[#allocation3 + $0x3c] sm:$0xff]
    %v164 = vld [vmem:[#allocation3 + $0x44] sm:$0xf]
    %v165 = vld [vmem:[#allocation3 + $0x48] sm:$0xff]
    %v166 = vld [vmem:[#allocation3 + $0x50] sm:$0xf]
    %v167 = vld [vmem:[#allocation3 + $0x54] sm:$0xff]
    %v168 = vld [vmem:[#allocation3 + $0x5c] sm:$0xf]
    %v169 = vld [vmem:[#allocation3 + $0x60] sm:$0xff]
    %v170 = vld [vmem:[#allocation3 + $0x68] sm:$0xf]
    %v171 = vld [vmem:[#allocation3 + $0x6c] sm:$0xff]
    %v172 = vld [vmem:[#allocation3 + $0x74] sm:$0xf]
    %v173 = vld [vmem:[#allocation3 + $0x78] sm:$0xff]
    %v174 = vld [vmem:[#allocation3 + $0x80] sm:$0xf]
    %v175 = vld [vmem:[#allocation3 + $0x84] sm:$0xff]
    %v176 = vld [vmem:[#allocation3 + $0x8c] sm:$0xf]
    %v177 = vld [vmem:[#allocation3 + $0x90] sm:$0xff]
    %v178 = vld [vmem:[#allocation3 + $0x98] sm:$0xf]
    %v179 = vld [vmem:[#allocation3 + $0x9c] sm:$0xff]
    %v180 = vld [vmem:[#allocation3 + $0xa4] sm:$0xf]
    %v181 = vld [vmem:[#allocation3 + $0xa8] sm:$0xff]
    %v182 = vld [vmem:[#allocation3 + $0xb0] sm:$0xf]
    %v183 = vld [vmem:[#allocation3 + $0xb4] sm:$0xff]
    %v184 = vld [vmem:[#allocation3 + $0xbc] sm:$0xf]
    %v185 = vld [vmem:[#allocation3 + $0xc0] sm:$0xff]
    %v186 = vld [vmem:[#allocation3 + $0xc8] sm:$0xf]
    %v187 = vld [vmem:[#allocation3 + $0xcc] sm:$0xff]
    %v188 = vld [vmem:[#allocation3 + $0xd4] sm:$0xf]
    %v189 = vld [vmem:[#allocation3 + $0xd8] sm:$0xff]
    %v190 = vld [vmem:[#allocation3 + $0xe0] sm:$0xf]
    %v191 = vld [vmem:[#allocation3 + $0xe4] sm:$0xff]
    %v192 = vld [vmem:[#allocation3 + $0xec] sm:$0xf]
    %v193 = vld [vmem:[#allocation3 + $0xf0] sm:$0xff]
    %v194 = vld [vmem:[#allocation3 + $0xf8] sm:$0xf]
    %v195 = vld [vmem:[#allocation3 + $0xfc] sm:$0xff]
    %v196 = vld [vmem:[#allocation3 + $0x104] sm:$0xf]
    %v197 = vld [vmem:[#allocation3 + $0x108] sm:$0xff]
    %v198 = vld [vmem:[#allocation3 + $0x110] sm:$0xf]
    %v199 = vld [vmem:[#allocation3 + $0x114] sm:$0xff]
    %v200 = vld [vmem:[#allocation3 + $0x11c] sm:$0xf]
    %v201 = vld [vmem:[#allocation3 + $0x120] sm:$0xff]
    %v202 = vld [vmem:[#allocation3 + $0x128] sm:$0xf]
    %v203 = vld [vmem:[#allocation3 + $0x12c] sm:$0xff]
    %v204 = vld [vmem:[#allocation3 + $0x134] sm:$0xf]
    %v205 = vld [vmem:[#allocation3 + $0x138] sm:$0xff]
    %v206 = vld [vmem:[#allocation3 + $0x140] sm:$0xf]
    %v207 = vld [vmem:[#allocation3 + $0x144] sm:$0xff]
    %v208 = vld [vmem:[#allocation3 + $0x14c] sm:$0xf]
    %v209 = vld [vmem:[#allocation3 + $0x150] sm:$0xff]
    %v210 = vld [vmem:[#allocation3 + $0x158] sm:$0xf]
    %v211 = vld [vmem:[#allocation3 + $0x15c] sm:$0xff]
    %v212 = vld [vmem:[#allocation3 + $0x164] sm:$0xf]
    %v213 = vld [vmem:[#allocation3 + $0x168] sm:$0xff]
    %v214 = vld [vmem:[#allocation3 + $0x170] sm:$0xf]
    %v215 = vld [vmem:[#allocation3 + $0x174] sm:$0xff]
    %v216 = vld [vmem:[#allocation3 + $0x17c] sm:$0xf]
    %v217 = vld [vmem:[#allocation3 + $0x180] sm:$0xff]
    %v218 = vld [vmem:[#allocation3 + $0x188] sm:$0xf]
    %v219 = vld [vmem:[#allocation3 + $0x18c] sm:$0xff]
    %v220 = vld [vmem:[#allocation3 + $0x194] sm:$0xf]
    %v221 = vld [vmem:[#allocation3 + $0x198] sm:$0xff]
    %v222 = vld [vmem:[#allocation3 + $0x1a0] sm:$0xf]
    %v223 = vld [vmem:[#allocation3 + $0x1a4] sm:$0xff]
    %v224 = vld [vmem:[#allocation3 + $0x1ac] sm:$0xf]
    %v225 = vld [vmem:[#allocation3 + $0x1b0] sm:$0xff]
    %v226 = vld [vmem:[#allocation3 + $0x1b8] sm:$0xf]
    %v227 = vld [vmem:[#allocation3 + $0x1bc] sm:$0xff]
    %v228 = vld [vmem:[#allocation3 + $0x1c4] sm:$0xf]
    %v229 = vld [vmem:[#allocation3 + $0x1c8] sm:$0xff]
    %v230 = vld [vmem:[#allocation3 + $0x1d0] sm:$0xf]
    %v231 = vld [vmem:[#allocation3 + $0x1d4] sm:$0xff]
    %v232 = vld [vmem:[#allocation3 + $0x1dc] sm:$0xf]
    %v233 = vld [vmem:[#allocation3 + $0x1e0] sm:$0xff]
    %v234 = vld [vmem:[#allocation3 + $0x1e8] sm:$0xf]
    %v235 = vld [vmem:[#allocation3 + $0x1ec] sm:$0xff]
    %v236 = vld [vmem:[#allocation3 + $0x1f4] sm:$0xf]
    %v237 = vld [vmem:[#allocation3 + $0x1f8] sm:$0xff]
    %v238 = vld [vmem:[#allocation3 + $0x200] sm:$0xf]
    %v239 = vld [vmem:[#allocation3 + $0x204] sm:$0xff]
    %v240 = vld [vmem:[#allocation3 + $0x20c] sm:$0xf]
    %v241 = vld [vmem:[#allocation3 + $0x210] sm:$0xff]
    %v242 = vld [vmem:[#allocation3 + $0x218] sm:$0xf]
    %v243 = vld [vmem:[#allocation3 + $0x21c] sm:$0xff]
    %v244 = vld [vmem:[#allocation3 + $0x224] sm:$0xf]
    %v245 = vld [vmem:[#allocation3 + $0x228] sm:$0xff]
    %v246 = vld [vmem:[#allocation3 + $0x230] sm:$0xf]
    %v247 = vld [vmem:[#allocation3 + $0x234] sm:$0xff]
    %v248 = vld [vmem:[#allocation3 + $0x23c] sm:$0xf]
    %v249 = vld [vmem:[#allocation3 + $0x240] sm:$0xff]
    %v250 = vld [vmem:[#allocation3 + $0x248] sm:$0xf]
    %v251 = vld [vmem:[#allocation3 + $0x24c] sm:$0xff]
    %v252 = vld [vmem:[#allocation3 + $0x254] sm:$0xf]
    %v253 = vld [vmem:[#allocation3 + $0x258] sm:$0xff]
    %v254 = vld [vmem:[#allocation3 + $0x260] sm:$0xf]
    %v357 = vunpack.c.l.b16 %v153
    %v358 = vunpack.c.h.b16 %v153
    %v359 = vunpack.c.l.b16 %v154
    %v360 = vunpack.c.l.b16 %v155
    %v361 = vunpack.c.h.b16 %v155
    %v362 = vunpack.c.l.b16 %v156
    %v363 = vunpack.c.l.b16 %v157
    %v364 = vunpack.c.h.b16 %v157
    %v365 = vunpack.c.l.b16 %v158
    %v366 = vunpack.c.l.b16 %v159
    %v367 = vunpack.c.h.b16 %v159
    %v368 = vunpack.c.l.b16 %v160
    %v369 = vunpack.c.l.b16 %v161
    %v370 = vunpack.c.h.b16 %v161
    %v371 = vunpack.c.l.b16 %v162
    %v372 = vunpack.c.l.b16 %v163
    %v373 = vunpack.c.h.b16 %v163
    %v374 = vunpack.c.l.b16 %v164
    %v375 = vunpack.c.l.b16 %v165
    %v376 = vunpack.c.h.b16 %v165
    %v377 = vunpack.c.l.b16 %v166
    %v378 = vunpack.c.l.b16 %v167
    %v379 = vunpack.c.h.b16 %v167
    %v380 = vunpack.c.l.b16 %v168
    %v381 = vunpack.c.l.b16 %v169
    %v382 = vunpack.c.h.b16 %v169
    %v383 = vunpack.c.l.b16 %v170
    %v384 = vunpack.c.l.b16 %v171
    %v385 = vunpack.c.h.b16 %v171
    %v386 = vunpack.c.l.b16 %v172
    %v387 = vunpack.c.l.b16 %v173
    %v388 = vunpack.c.h.b16 %v173
    %v389 = vunpack.c.l.b16 %v174
    %v390 = vunpack.c.l.b16 %v175
    %v391 = vunpack.c.h.b16 %v175
    %v392 = vunpack.c.l.b16 %v176
    %v393 = vunpack.c.l.b16 %v177
    %v394 = vunpack.c.h.b16 %v177
    %v395 = vunpack.c.l.b16 %v178
    %v396 = vunpack.c.l.b16 %v179
    %v397 = vunpack.c.h.b16 %v179
    %v398 = vunpack.c.l.b16 %v180
    %v399 = vunpack.c.l.b16 %v181
    %v400 = vunpack.c.h.b16 %v181
    %v401 = vunpack.c.l.b16 %v182
    %v402 = vunpack.c.l.b16 %v183
    %v403 = vunpack.c.h.b16 %v183
    %v404 = vunpack.c.l.b16 %v184
    %v405 = vunpack.c.l.b16 %v185
    %v406 = vunpack.c.h.b16 %v185
    %v407 = vunpack.c.l.b16 %v186
    %v408 = vunpack.c.l.b16 %v187
    %v409 = vunpack.c.h.b16 %v187
    %v410 = vunpack.c.l.b16 %v188
    %v411 = vunpack.c.l.b16 %v189
    %v412 = vunpack.c.h.b16 %v189
    %v413 = vunpack.c.l.b16 %v190
    %v414 = vunpack.c.l.b16 %v191
    %v415 = vunpack.c.h.b16 %v191
    %v416 = vunpack.c.l.b16 %v192
    %v417 = vunpack.c.l.b16 %v193
    %v418 = vunpack.c.h.b16 %v193
    %v419 = vunpack.c.l.b16 %v194
    %v420 = vunpack.c.l.b16 %v195
    %v421 = vunpack.c.h.b16 %v195
    %v422 = vunpack.c.l.b16 %v196
    %v423 = vunpack.c.l.b16 %v197
    %v424 = vunpack.c.h.b16 %v197
    %v425 = vunpack.c.l.b16 %v198
    %v426 = vunpack.c.l.b16 %v199
    %v427 = vunpack.c.h.b16 %v199
    %v428 = vunpack.c.l.b16 %v200
    %v429 = vunpack.c.l.b16 %v201
    %v430 = vunpack.c.h.b16 %v201
    %v431 = vunpack.c.l.b16 %v202
    %v432 = vunpack.c.l.b16 %v203
    %v433 = vunpack.c.h.b16 %v203
    %v434 = vunpack.c.l.b16 %v204
    %v435 = vunpack.c.l.b16 %v205
    %v436 = vunpack.c.h.b16 %v205
    %v437 = vunpack.c.l.b16 %v206
    %v438 = vunpack.c.l.b16 %v207
    %v439 = vunpack.c.h.b16 %v207
    %v440 = vunpack.c.l.b16 %v208
    %v441 = vunpack.c.l.b16 %v209
    %v442 = vunpack.c.h.b16 %v209
    %v443 = vunpack.c.l.b16 %v210
    %v444 = vunpack.c.l.b16 %v211
    %v445 = vunpack.c.h.b16 %v211
    %v446 = vunpack.c.l.b16 %v212
    %v447 = vunpack.c.l.b16 %v213
    %v448 = vunpack.c.h.b16 %v213
    %v449 = vunpack.c.l.b16 %v214
    %v450 = vunpack.c.l.b16 %v215
    %v451 = vunpack.c.h.b16 %v215
    %v452 = vunpack.c.l.b16 %v216
    %v453 = vunpack.c.l.b16 %v217
    %v454 = vunpack.c.h.b16 %v217
    %v455 = vunpack.c.l.b16 %v218
    %v456 = vunpack.c.l.b16 %v219
    %v457 = vunpack.c.h.b16 %v219
    %v458 = vunpack.c.l.b16 %v220
    %v459 = vunpack.c.l.b16 %v221
    %v460 = vunpack.c.h.b16 %v221
    %v461 = vunpack.c.l.b16 %v222
    %v462 = vunpack.c.l.b16 %v223
    %v463 = vunpack.c.h.b16 %v223
    %v464 = vunpack.c.l.b16 %v224
    %v465 = vunpack.c.l.b16 %v225
    %v466 = vunpack.c.h.b16 %v225
    %v467 = vunpack.c.l.b16 %v226
    %v468 = vunpack.c.l.b16 %v227
    %v469 = vunpack.c.h.b16 %v227
    %v470 = vunpack.c.l.b16 %v228
    %v471 = vunpack.c.l.b16 %v229
    %v472 = vunpack.c.h.b16 %v229
    %v473 = vunpack.c.l.b16 %v230
    %v474 = vunpack.c.l.b16 %v231
    %v475 = vunpack.c.h.b16 %v231
    %v476 = vunpack.c.l.b16 %v232
    %v477 = vunpack.c.l.b16 %v233
    %v478 = vunpack.c.h.b16 %v233
    %v479 = vunpack.c.l.b16 %v234
    %v480 = vunpack.c.l.b16 %v235
    %v481 = vunpack.c.h.b16 %v235
    %v482 = vunpack.c.l.b16 %v236
    %v483 = vunpack.c.l.b16 %v237
    %v484 = vunpack.c.h.b16 %v237
    %v485 = vunpack.c.l.b16 %v238
    %v486 = vunpack.c.l.b16 %v239
    %v487 = vunpack.c.h.b16 %v239
    %v488 = vunpack.c.l.b16 %v240
    %v489 = vunpack.c.l.b16 %v241
    %v490 = vunpack.c.h.b16 %v241
    %v491 = vunpack.c.l.b16 %v242
    %v492 = vunpack.c.l.b16 %v243
    %v493 = vunpack.c.h.b16 %v243
    %v494 = vunpack.c.l.b16 %v244
    %v495 = vunpack.c.l.b16 %v245
    %v496 = vunpack.c.h.b16 %v245
    %v497 = vunpack.c.l.b16 %v246
    %v498 = vunpack.c.l.b16 %v247
    %v499 = vunpack.c.h.b16 %v247
    %v500 = vunpack.c.l.b16 %v248
    %v501 = vunpack.c.l.b16 %v249
    %v502 = vunpack.c.h.b16 %v249
    %v503 = vunpack.c.l.b16 %v250
    %v504 = vunpack.c.l.b16 %v251
    %v505 = vunpack.c.h.b16 %v251
    %v506 = vunpack.c.l.b16 %v252
    %v507 = vunpack.c.l.b16 %v253
    %v508 = vunpack.c.h.b16 %v253
    %v509 = vunpack.c.l.b16 %v254
    %v510 = vpack.c.b16 %v360, %v357
    %v511 = vpack.c.b16 %v361, %v358
    %v512 = vpack.c.b16 %v362, %v359
    %v513 = vpack.c.b16 %v366, %v363
    %v514 = vpack.c.b16 %v367, %v364
    %v515 = vpack.c.b16 %v368, %v365
    %v516 = vpack.c.b16 %v372, %v369
    %v517 = vpack.c.b16 %v373, %v370
    %v518 = vpack.c.b16 %v374, %v371
    %v519 = vpack.c.b16 %v378, %v375
    %v520 = vpack.c.b16 %v379, %v376
    %v521 = vpack.c.b16 %v380, %v377
    %v522 = vpack.c.b16 %v384, %v381
    %v523 = vpack.c.b16 %v385, %v382
    %v524 = vpack.c.b16 %v386, %v383
    %v525 = vpack.c.b16 %v390, %v387
    %v526 = vpack.c.b16 %v391, %v388
    %v527 = vpack.c.b16 %v392, %v389
    %v528 = vpack.c.b16 %v396, %v393
    %v529 = vpack.c.b16 %v397, %v394
    %v530 = vpack.c.b16 %v398, %v395
    %v531 = vpack.c.b16 %v402, %v399
    %v532 = vpack.c.b16 %v403, %v400
    %v533 = vpack.c.b16 %v404, %v401
    %v534 = vpack.c.b16 %v408, %v405
    %v535 = vpack.c.b16 %v409, %v406
    %v536 = vpack.c.b16 %v410, %v407
    %v537 = vpack.c.b16 %v414, %v411
    %v538 = vpack.c.b16 %v415, %v412
    %v539 = vpack.c.b16 %v416, %v413
    %v540 = vpack.c.b16 %v420, %v417
    %v541 = vpack.c.b16 %v421, %v418
    %v542 = vpack.c.b16 %v422, %v419
    %v543 = vpack.c.b16 %v426, %v423
    %v544 = vpack.c.b16 %v427, %v424
    %v545 = vpack.c.b16 %v428, %v425
    %v546 = vpack.c.b16 %v432, %v429
    %v547 = vpack.c.b16 %v433, %v430
    %v548 = vpack.c.b16 %v434, %v431
    %v549 = vpack.c.b16 %v438, %v435
    %v550 = vpack.c.b16 %v439, %v436
    %v551 = vpack.c.b16 %v440, %v437
    %v552 = vpack.c.b16 %v444, %v441
    %v553 = vpack.c.b16 %v445, %v442
    %v554 = vpack.c.b16 %v446, %v443
    %v555 = vpack.c.b16 %v450, %v447
    %v556 = vpack.c.b16 %v451, %v448
    %v557 = vpack.c.b16 %v452, %v449
    %v558 = vpack.c.b16 %v456, %v453
    %v559 = vpack.c.b16 %v457, %v454
    %v560 = vpack.c.b16 %v458, %v455
    %v561 = vpack.c.b16 %v462, %v459
    %v562 = vpack.c.b16 %v463, %v460
    %v563 = vpack.c.b16 %v464, %v461
    %v564 = vpack.c.b16 %v468, %v465
    %v565 = vpack.c.b16 %v469, %v466
    %v566 = vpack.c.b16 %v470, %v467
    %v567 = vpack.c.b16 %v474, %v471
    %v568 = vpack.c.b16 %v475, %v472
    %v569 = vpack.c.b16 %v476, %v473
    %v570 = vpack.c.b16 %v480, %v477
    %v571 = vpack.c.b16 %v481, %v478
    %v572 = vpack.c.b16 %v482, %v479
    %v573 = vpack.c.b16 %v486, %v483
    %v574 = vpack.c.b16 %v487, %v484
    %v575 = vpack.c.b16 %v488, %v485
    %v576 = vpack.c.b16 %v492, %v489
    %v577 = vpack.c.b16 %v493, %v490
    %v578 = vpack.c.b16 %v494, %v491
    %v579 = vpack.c.b16 %v498, %v495
    %v580 = vpack.c.b16 %v499, %v496
    %v581 = vpack.c.b16 %v500, %v497
    %v582 = vpack.c.b16 %v504, %v501
    %v583 = vpack.c.b16 %v505, %v502
    %v584 = vpack.c.b16 %v506, %v503
    %v585 = vpack.c.b16 %v507, %v507
    %v586 = vpack.c.b16 %v508, %v508
    %v587 = vpack.c.b16 %v509, %v509
    %vm663 = vcmask 195584
    %v665 = vsel %vm663, %v152, 0
    %vm667 = vcmask 1043456
    %v669 = vsel %vm667, %v585, 0
    %v672 = vsel %vm667, %v586, 0
    %v675 = vsel %vm667, %v587, 0
    %677 = vmatpush.bf16.msra.mxu0 %v531
    %678 = vmatpush.bf16.msra.mxu0 %v528
    %679 = vmatpush.bf16.msra.mxu0 %v525
    %680 = vmatpush.bf16.msra.mxu0 %v522
    %681 = vmatpush.bf16.msra.mxu0 %v519
    %682 = vmatpush.bf16.msra.mxu0 %v516
    %683 = vmatpush.bf16.msra.mxu0 %v513
    %684 = vmatpush.bf16.msra.mxu0 %v510
    %685 = vmatmul.bf16.gmra.mxu0 %v149
    %v686 = vpop.f32.mrf.mxu0
    %v687 = vadd.f32 0.0, %v686
    %v688 = vpop.f32.mrf.mxu0
    %689 = vdwg.mxu0
    %690 = vmatpush.bf16.msra.mxu0 %v555
    %691 = vmatpush.bf16.msra.mxu0 %v552
    %692 = vmatpush.bf16.msra.mxu0 %v549
    %693 = vmatpush.bf16.msra.mxu0 %v546
    %694 = vmatpush.bf16.msra.mxu0 %v543
    %695 = vmatpush.bf16.msra.mxu0 %v540
    %696 = vmatpush.bf16.msra.mxu0 %v537
    %697 = vmatpush.bf16.msra.mxu0 %v534
    %698 = vmatmul.bf16.gmra.mxu0 %v150
    %v699 = vpop.f32.mrf.mxu0
    %v700 = vadd.f32 %v687, %v699
    %v701 = vpop.f32.mrf.mxu0
    %702 = vdwg.mxu0
    %703 = vmatpush.bf16.msra.mxu0 %v579
    %704 = vmatpush.bf16.msra.mxu0 %v576
    %705 = vmatpush.bf16.msra.mxu0 %v573
    %706 = vmatpush.bf16.msra.mxu0 %v570
    %707 = vmatpush.bf16.msra.mxu0 %v567
    %708 = vmatpush.bf16.msra.mxu0 %v564
    %709 = vmatpush.bf16.msra.mxu0 %v561
    %710 = vmatpush.bf16.msra.mxu0 %v558
    %711 = vmatmul.bf16.gmra.mxu0 %v151
    %v712 = vpop.f32.mrf.mxu0
    %v713 = vadd.f32 %v700, %v712
    %v714 = vpop.f32.mrf.mxu0
    %715 = vdwg.mxu0
    %716 = vmatpush.bf16.msra.mxu0 0
    %717 = vmatpush.bf16.msra.mxu0 0
    %718 = vmatpush.bf16.msra.mxu0 0
    %719 = vmatpush.bf16.msra.mxu0 0
    %720 = vmatpush.bf16.msra.mxu0 0
    %721 = vmatpush.bf16.msra.mxu0 0
    %722 = vmatpush.bf16.msra.mxu0 %v669
    %723 = vmatpush.bf16.msra.mxu0 %v582
    %724 = vmatmul.bf16.gmra.mxu0 %v665
    %v725 = vpop.f32.mrf.mxu0
    %v726 = vadd.f32 %v713, %v725
    %v727 = vpop.f32.mrf.mxu0
    %728 = vdwg.mxu0
    %729 = vmatpush.bf16.msra.mxu0 %v532
    %730 = vmatpush.bf16.msra.mxu0 %v529
    %731 = vmatpush.bf16.msra.mxu0 %v526
    %732 = vmatpush.bf16.msra.mxu0 %v523
    %733 = vmatpush.bf16.msra.mxu0 %v520
    %734 = vmatpush.bf16.msra.mxu0 %v517
    %735 = vmatpush.bf16.msra.mxu0 %v514
    %736 = vmatpush.bf16.msra.mxu0 %v511
    %737 = vmatmul.bf16.gmra.mxu0 %v149
    %v738 = vpop.f32.mrf.mxu0
    %v739 = vadd.f32 0.0, %v738
    %v740 = vpop.f32.mrf.mxu0
    %741 = vdwg.mxu0
    %742 = vmatpush.bf16.msra.mxu0 %v556
    %743 = vmatpush.bf16.msra.mxu0 %v553
    %744 = vmatpush.bf16.msra.mxu0 %v550
    %745 = vmatpush.bf16.msra.mxu0 %v547
    %746 = vmatpush.bf16.msra.mxu0 %v544
    %747 = vmatpush.bf16.msra.mxu0 %v541
    %748 = vmatpush.bf16.msra.mxu0 %v538
    %749 = vmatpush.bf16.msra.mxu0 %v535
    %750 = vmatmul.bf16.gmra.mxu0 %v150
    %v751 = vpop.f32.mrf.mxu0
    %v752 = vadd.f32 %v739, %v751
    %v753 = vpop.f32.mrf.mxu0
    %754 = vdwg.mxu0
    %755 = vmatpush.bf16.msra.mxu0 %v580
    %756 = vmatpush.bf16.msra.mxu0 %v577
    %757 = vmatpush.bf16.msra.mxu0 %v574
    %758 = vmatpush.bf16.msra.mxu0 %v571
    %759 = vmatpush.bf16.msra.mxu0 %v568
    %760 = vmatpush.bf16.msra.mxu0 %v565
    %761 = vmatpush.bf16.msra.mxu0 %v562
    %762 = vmatpush.bf16.msra.mxu0 %v559
    %763 = vmatmul.bf16.gmra.mxu0 %v151
    %v764 = vpop.f32.mrf.mxu0
    %v765 = vadd.f32 %v752, %v764
    %v766 = vpop.f32.mrf.mxu0
    %767 = vdwg.mxu0
    %768 = vmatpush.bf16.msra.mxu0 0
    %769 = vmatpush.bf16.msra.mxu0 0
    %770 = vmatpush.bf16.msra.mxu0 0
    %771 = vmatpush.bf16.msra.mxu0 0
    %772 = vmatpush.bf16.msra.mxu0 0
    %773 = vmatpush.bf16.msra.mxu0 0
    %774 = vmatpush.bf16.msra.mxu0 %v672
    %775 = vmatpush.bf16.msra.mxu0 %v583
    %776 = vmatmul.bf16.gmra.mxu0 %v665
    %v777 = vpop.f32.mrf.mxu0
    %v778 = vadd.f32 %v765, %v777
    %v779 = vpop.f32.mrf.mxu0
    %780 = vdwg.mxu0
    %781 = vmatpush.bf16.msra.mxu0 %v533
    %782 = vmatpush.bf16.msra.mxu0 %v530
    %783 = vmatpush.bf16.msra.mxu0 %v527
    %784 = vmatpush.bf16.msra.mxu0 %v524
    %785 = vmatpush.bf16.msra.mxu0 %v521
    %786 = vmatpush.bf16.msra.mxu0 %v518
    %787 = vmatpush.bf16.msra.mxu0 %v515
    %788 = vmatpush.bf16.msra.mxu0 %v512
    %789 = vmatmul.bf16.gmra.mxu0 %v149
    %v790 = vpop.f32.mrf.mxu0
    %v791 = vadd.f32 0.0, %v790
    %v792 = vpop.f32.mrf.mxu0
    %793 = vdwg.mxu0
    %794 = vmatpush.bf16.msra.mxu0 %v557
    %795 = vmatpush.bf16.msra.mxu0 %v554
    %796 = vmatpush.bf16.msra.mxu0 %v551
    %797 = vmatpush.bf16.msra.mxu0 %v548
    %798 = vmatpush.bf16.msra.mxu0 %v545
    %799 = vmatpush.bf16.msra.mxu0 %v542
    %800 = vmatpush.bf16.msra.mxu0 %v539
    %801 = vmatpush.bf16.msra.mxu0 %v536
    %802 = vmatmul.bf16.gmra.mxu0 %v150
    %v803 = vpop.f32.mrf.mxu0
    %v804 = vadd.f32 %v791, %v803
    %v805 = vpop.f32.mrf.mxu0
    %806 = vdwg.mxu0
    %807 = vmatpush.bf16.msra.mxu0 %v581
    %808 = vmatpush.bf16.msra.mxu0 %v578
    %809 = vmatpush.bf16.msra.mxu0 %v575
    %810 = vmatpush.bf16.msra.mxu0 %v572
    %811 = vmatpush.bf16.msra.mxu0 %v569
    %812 = vmatpush.bf16.msra.mxu0 %v566
    %813 = vmatpush.bf16.msra.mxu0 %v563
    %814 = vmatpush.bf16.msra.mxu0 %v560
    %815 = vmatmul.bf16.gmra.mxu0 %v151
    %v816 = vpop.f32.mrf.mxu0
    %v817 = vadd.f32 %v804, %v816
    %v818 = vpop.f32.mrf.mxu0
    %819 = vdwg.mxu0
    %820 = vmatpush.bf16.msra.mxu0 0
    %821 = vmatpush.bf16.msra.mxu0 0
    %822 = vmatpush.bf16.msra.mxu0 0
    %823 = vmatpush.bf16.msra.mxu0 0
    %824 = vmatpush.bf16.msra.mxu0 0
    %825 = vmatpush.bf16.msra.mxu0 0
    %826 = vmatpush.bf16.msra.mxu0 %v675
    %827 = vmatpush.bf16.msra.mxu0 %v584
    %828 = vmatmul.bf16.gmra.mxu0 %v665
    %v829 = vpop.f32.mrf.mxu0
    %v830 = vadd.f32 %v817, %v829
    %v831 = vpop.f32.mrf.mxu0
    %832 = vdwg.mxu0
    %v833 = vmax.f32 %v726, 0.0
    %v834 = vmax.f32 %v778, 0.0
    %v835 = vmax.f32 %v830, 0.0
    %v836 = vld [vmem:[%s4] sm:$0x7]
    %v838 = vperm.slane %v836, 0
    %v839 = vperm.slane %v836, 1
    %v840 = vperm.slane %v836, 2
    %v844 = vmul.f32 %v833, %v838
    %v845 = vmul.f32 %v834, %v839
    %v846 = vmul.f32 %v835, %v840
    %v847 = vadd.f32 %v844, %v845
    %v848 = vadd.f32 %v847, %v846
    %849 = vadd.xlane.f32.xlu0 %v848
    %v850 = vpop.xlane.xlu0 %849
    %v851 = vld [vmem:[#allocation2] sm:$0x1]
    %v853 = vperm.slane %v851, 0
    %v855 = vadd.f32 %v850, %v853
    %vm856 = vcmask 7168
    %857 = vst.msk [vmem:[%s6] sm:$0xff] %vm856, %v855
    // Predicated region
    $region30: #{critic_forward.1} parent=1 // pred_check
      _
    $region31: #{critic_forward.1} parent=1 // pred_check_branch
      %859 = sbr.rel (0) target = $region33
    $region32: #{critic_forward.1} parent=1 // pred_region
      _
    $region33: #{critic_forward.1} parent=1 // pred_fallthru
      _
    // Predicated region
    $region34: #{critic_forward.1} parent=1 // pred_check
      _
    $region35: #{critic_forward.1} parent=1 // pred_check_branch
      %861 = sbr.rel (0) target = $region37
    $region36: #{critic_forward.1} parent=1 // pred_region
      _
    $region37: #{critic_forward.1} parent=1 // pred_fallthru
      _
    %862 = vsyncpa [#allocation4], 1

</llo_original>
